<compile_context>
chip_gen: v7x
topology: tpu7x:2x2x1
jax: 0.10.0
libtpu: 0.0.40
codegen_flags: <defaults>
</compile_context>

<pallas_src>
import jax
import jax.numpy as jnp
from jax.experimental import pallas as pl
from jax.experimental.pallas import tpu as pltpu


def _cheby_conv_kernel(x_ref, lap_ref, wt_ref, b_ref, o_ref, acc_ref):
    # x_ref:   (1, N, c_in*T)        per-batch input, lane index c*T + t
    # lap_ref: (1, N, N)             Chebyshev polynomial L_k for current grid k
    # wt_ref:  (1, c_in*T, T*c_out)  structured channel-mix weight for current k
    # b_ref:   (1, T*c_out)          bias tiled over t (lane index t*c_out + o)
    # o_ref:   (1, N, T*c_out)       per-batch output block (lane-dense)
    # acc_ref: (N, T*c_out) f32      VMEM accumulator across the k grid axis
    k = pl.program_id(1)

    @pl.when(k == 0)
    def _():
        acc_ref[...] = jnp.zeros_like(acc_ref)

    # Graph convolution for order k, batched over all input channels (one wide
    # MXU matmul): xg[q, c*T+t] = sum_n L_k[q, n] * x[b, c, n, t]
    xg = jnp.dot(lap_ref[0], x_ref[0], preferred_element_type=jnp.float32)

    # Channel mixing (1x1 conv) for order k as a single MXU matmul with the
    # block-structured weight; accumulates over k into the VMEM scratch.
    acc_ref[...] += jnp.dot(xg, wt_ref[0], preferred_element_type=jnp.float32)

    @pl.when(k == pl.num_programs(1) - 1)
    def _():
        o_ref[0] = (acc_ref[...] + b_ref[...]).astype(o_ref.dtype)


def _cheby_stack(adj, K):
    """[L_0=I, L_1=adj, L_k = 2*adj@L_{k-1} - L_{k-2}] computed in float32."""
    N = adj.shape[0]
    adj32 = adj.astype(jnp.float32)
    L0 = jnp.eye(N, dtype=jnp.float32)
    L1 = adj32
    Ls = [L0, L1]
    for _ in range(2, K):
        L2 = 2.0 * jnp.matmul(adj32, L1) - L0
        L0, L1 = L1, L2
        Ls.append(L2)
    return jnp.stack(Ls, axis=0)                       # (K, N, N) float32


def cheby_conv_forward(x, adj, weight, bias, K):
    """x: (B, c_in, N, T); adj: (N, N); weight: (c_out, c_in*K) col m=c*K+k; bias: (c_out,)."""
    B, c_in, N, T = x.shape
    c_out = weight.shape[0]
    dtype = x.dtype
    assert K >= 2, "PyTorch reference always stacks I and adj (K >= 2)"

    # Chebyshev polynomial stack in fp32 (cast to compute dtype afterwards).
    lap = _cheby_stack(adj, K).astype(dtype)           # (K, N, N)

    # x -> (B, N, c_in*T), lane index c*T + t   (layout plumbing in the wrapper)
    x2 = jnp.transpose(x, (0, 2, 1, 3)).reshape(B, N, c_in * T)

    # Structured channel-mix weight:
    #   wt[k, c*T+t, t'*c_out+o] = weight[o, c*K+k] * (t == t')
    w_k = weight.reshape(c_out, c_in, K).transpose(2, 1, 0).astype(jnp.float32)  # (K, c_in, c_out)
    eye_t = jnp.eye(T, dtype=jnp.float32)
    w_tilde = jnp.einsum('kco,ts->kctso', w_k, eye_t)
    w_tilde = w_tilde.reshape(K, c_in * T, T * c_out).astype(dtype)

    # Bias tiled along the lane-dense output axis (lane index t*c_out + o).
    bias_t = jnp.tile(bias.astype(jnp.float32), T).reshape(1, T * c_out)

    out_flat = pl.pallas_call(
        _cheby_conv_kernel,
        out_shape=jax.ShapeDtypeStruct((B, N, T * c_out), dtype),
        grid_spec=pltpu.PrefetchScalarGridSpec(
            num_scalar_prefetch=0,
            grid=(B, K),                               # batch parallel, k = reduction
            in_specs=[
                pl.BlockSpec((1, N, c_in * T), lambda b, k: (b, 0, 0)),
                pl.BlockSpec((1, N, N), lambda b, k: (k, 0, 0)),
                pl.BlockSpec((1, c_in * T, T * c_out), lambda b, k: (k, 0, 0)),
                pl.BlockSpec((1, T * c_out), lambda b, k: (0, 0)),
            ],
            out_specs=pl.BlockSpec((1, N, T * c_out), lambda b, k: (b, 0, 0)),
            scratch_shapes=[pltpu.VMEM((N, T * c_out), jnp.float32)],
        ),
        compiler_params=pltpu.CompilerParams(
            dimension_semantics=("parallel", "arbitrary"),
            vmem_limit_bytes=64 * 1024 * 1024,
        ),
    )(x2, lap, w_tilde, bias_t)

    # (B, N, T*c_out) -> (B, N, T, c_out) -> (B, c_out, N, T)  (NCHW like PyTorch)
    return out_flat.reshape(B, N, T, c_out).transpose(0, 3, 1, 2)


def cheby_conv_reference(x, adj, weight, bias, K):
    """Pure-JAX mirror of the PyTorch forward, for verification."""
    B, c_in, N, T = x.shape
    Lap = _cheby_stack(adj, K).astype(x.dtype)
    Lap_t = jnp.transpose(Lap, (0, 2, 1))              # transpose(-1, -2)
    xg = jnp.einsum('bcnl,knq->bckql', x, Lap_t)
    xg = xg.reshape(B, c_in * K, N, T)                 # channel index m = c*K + k
    out = jnp.einsum('om,bmnl->bonl', weight, xg) + bias[None, :, None, None]
    return out


if __name__ == "__main__":
    B, c_in, c_out, N, T, K = 2, 4, 8, 16, 16, 3

    key = jax.random.PRNGKey(0)
    k1, k2, k3, k4 = jax.random.split(key, 4)
    x = jax.random.normal(k1, (B, c_in, N, T), dtype=jnp.float32)
    a = jax.random.normal(k2, (N, N), dtype=jnp.float32)
    adj = 0.5 * (a + a.T) / jnp.sqrt(jnp.float32(N))   # symmetric "laplacian"-like
    # deterministic synthetic parameters (Conv2d(c_in*K, c_out, 1, bias=True))
    weight = 0.1 * jax.random.normal(k3, (c_out, c_in * K), dtype=jnp.float32)
    bias = 0.1 * jax.random.normal(k4, (c_out,), dtype=jnp.float32)

    out = cheby_conv_forward(x, adj, weight, bias, K)
    out = jax.block_until_ready(out)

    ref = cheby_conv_reference(x, adj, weight, bias, K)
    assert out.shape == (B, c_out, N, T)
    err = float(jnp.max(jnp.abs(out - ref)))
    assert jnp.allclose(out, ref, atol=1e-3, rtol=1e-3), err
    print("KERNEL_OK")
</pallas_src>

<mosaic_0001>
module attributes {stable_mosaic.version = 11 : i64} {
  func.func @_cheby_conv_kernel(%arg0: i32, %arg1: i32, %arg2: memref<1x16x64xf32, #tpu.memory_space<vmem>>, %arg3: memref<1x16x16xf32, #tpu.memory_space<vmem>>, %arg4: memref<1x64x128xf32, #tpu.memory_space<vmem>>, %arg5: memref<1x128xf32, #tpu.memory_space<vmem>>, %arg6: memref<1x16x128xf32, #tpu.memory_space<vmem>>, %arg7: memref<16x128xf32, #tpu.memory_space<vmem>>) attributes {dimension_semantics = [#tpu.dimension_semantics<parallel>, #tpu.dimension_semantics<arbitrary>], iteration_bounds = array<i64: 2, 3>, scalar_prefetch = 0 : i64, scratch_operands = 1 : i64, tpu.core_type = #tpu.core_type<tc>, window_params = [{transform_indices = @transform_0, window_bounds = array<i64: 1, 16, 64>}, {transform_indices = @transform_1, window_bounds = array<i64: 1, 16, 16>}, {transform_indices = @transform_2, window_bounds = array<i64: 1, 64, 128>}, {pipeline_mode = #tpu.pipeline_mode<synchronous>, transform_indices = @transform_3, window_bounds = array<i64: 1, 128>}, {transform_indices = @transform_4, window_bounds = array<i64: 1, 16, 128>}]} {
    %c0_i32 = arith.constant 0 : i32
    %0 = arith.cmpi eq, %arg1, %c0_i32 : i32
    %1 = arith.extui %0 : i1 to i32
    %c0_i32_0 = arith.constant 0 : i32
    %2 = arith.cmpi ne, %1, %c0_i32_0 : i32
    scf.if %2 {
      %cst_15 = arith.constant 0.000000e+00 : f32
      %17 = vector.broadcast %cst_15 : f32 to vector<16x128xf32>
      %c0_16 = arith.constant 0 : index
      %c0_17 = arith.constant 0 : index
      %18 = vector.load %arg7[%c0_16, %c0_17] : memref<16x128xf32, #tpu.memory_space<vmem>>, vector<16x128xf32>
      tpu.vector_store %arg7[%c0_16, %c0_17], %17 {strides = array<i32>} : memref<16x128xf32, #tpu.memory_space<vmem>>, vector<16x128xf32>,
    } else {
    }
    %c0 = arith.constant 0 : index
    %c0_1 = arith.constant 0 : index
    %c0_2 = arith.constant 0 : index
    %3 = vector.load %arg3[%c0, %c0_1, %c0_2] : memref<1x16x16xf32, #tpu.memory_space<vmem>>, vector<1x16x16xf32>
    %4 = vector.shape_cast %3 : vector<1x16x16xf32> to vector<16x16xf32>
    %c0_3 = arith.constant 0 : index
    %c0_4 = arith.constant 0 : index
    %c0_5 = arith.constant 0 : index
    %5 = vector.load %arg2[%c0_3, %c0_4, %c0_5] : memref<1x16x64xf32, #tpu.memory_space<vmem>>, vector<1x16x64xf32>
    %6 = vector.shape_cast %5 : vector<1x16x64xf32> to vector<16x64xf32>
    %cst = arith.constant dense<0.000000e+00> : vector<16x64xf32>
    %7 = tpu.matmul %4, %6, %cst {dimension_numbers = #tpu.dot_dimension_numbers<[1], [0], [0], [1], [0, 0, 1, 1], [], []>} : vector<16x16xf32>, vector<16x64xf32>, vector<16x64xf32> -> vector<16x64xf32>
    %c0_6 = arith.constant 0 : index
    %c0_7 = arith.constant 0 : index
    %8 = vector.load %arg7[%c0_6, %c0_7] : memref<16x128xf32, #tpu.memory_space<vmem>>, vector<16x128xf32>
    %c0_8 = arith.constant 0 : index
    %c0_9 = arith.constant 0 : index
    %c0_10 = arith.constant 0 : index
    %9 = vector.load %arg4[%c0_8, %c0_9, %c0_10] : memref<1x64x128xf32, #tpu.memory_space<vmem>>, vector<1x64x128xf32>
    %10 = vector.shape_cast %9 : vector<1x64x128xf32> to vector<64x128xf32>
    %cst_11 = arith.constant dense<0.000000e+00> : vector<16x128xf32>
    %11 = tpu.matmul %7, %10, %cst_11 {dimension_numbers = #tpu.dot_dimension_numbers<[1], [0], [0], [1], [0, 0, 1, 1], [], []>} : vector<16x64xf32>, vector<64x128xf32>, vector<16x128xf32> -> vector<16x128xf32>
    %12 = arith.addf %8, %11 : vector<16x128xf32>
    %c0_12 = arith.constant 0 : index
    %c0_13 = arith.constant 0 : index
    %13 = vector.load %arg7[%c0_12, %c0_13] : memref<16x128xf32, #tpu.memory_space<vmem>>, vector<16x128xf32>
    tpu.vector_store %arg7[%c0_12, %c0_13], %12 {strides = array<i32>} : memref<16x128xf32, #tpu.memory_space<vmem>>, vector<16x128xf32>,
    %c2_i32 = arith.constant 2 : i32
    %14 = arith.cmpi eq, %arg1, %c2_i32 : i32
    %15 = arith.extui %14 : i1 to i32
    %c0_i32_14 = arith.constant 0 : i32
    %16 = arith.cmpi ne, %15, %c0_i32_14 : i32
    scf.if %16 {
      %c0_15 = arith.constant 0 : index
      %c0_16 = arith.constant 0 : index
      %17 = vector.load %arg7[%c0_15, %c0_16] : memref<16x128xf32, #tpu.memory_space<vmem>>, vector<16x128xf32>
      %c0_17 = arith.constant 0 : index
      %c0_18 = arith.constant 0 : index
      %18 = vector.load %arg5[%c0_17, %c0_18] : memref<1x128xf32, #tpu.memory_space<vmem>>, vector<1x128xf32>
      %19 = vector.broadcast %18 : vector<1x128xf32> to vector<16x128xf32>
      %20 = arith.addf %17, %19 : vector<16x128xf32>
      %c0_19 = arith.constant 0 : index
      %c0_20 = arith.constant 0 : index
      %c0_21 = arith.constant 0 : index
      %21 = vector.load %arg6[%c0_19, %c0_20, %c0_21] : memref<1x16x128xf32, #tpu.memory_space<vmem>>, vector<1x16x128xf32>
      %22 = vector.shape_cast %21 : vector<1x16x128xf32> to vector<16x128xf32>
      %23 = vector.shape_cast %20 : vector<16x128xf32> to vector<1x16x128xf32>
      tpu.vector_store %arg6[%c0_19, %c0_20, %c0_21], %23 {strides = array<i32>} : memref<1x16x128xf32, #tpu.memory_space<vmem>>, vector<1x16x128xf32>,
    } else {
    }
    return
  }
  func.func @transform_0(%arg0: i32, %arg1: i32) -> (i32, i32, i32) {
    %c0_i32 = arith.constant 0 : i32
    %c0_i32_0 = arith.constant 0 : i32
    %c0_i32_1 = arith.constant 0 : i32
    return %arg0, %c0_i32, %c0_i32_0 : i32, i32, i32
  }
  func.func @transform_1(%arg0: i32, %arg1: i32) -> (i32, i32, i32) {
    %c0_i32 = arith.constant 0 : i32
    %c0_i32_0 = arith.constant 0 : i32
    %c0_i32_1 = arith.constant 0 : i32
    return %arg1, %c0_i32, %c0_i32_0 : i32, i32, i32
  }
  func.func @transform_2(%arg0: i32, %arg1: i32) -> (i32, i32, i32) {
    %c0_i32 = arith.constant 0 : i32
    %c0_i32_0 = arith.constant 0 : i32
    %c0_i32_1 = arith.constant 0 : i32
    return %arg1, %c0_i32, %c0_i32_0 : i32, i32, i32
  }
  func.func @transform_3(%arg0: i32, %arg1: i32) -> (i32, i32) {
    %c0_i32 = arith.constant 0 : i32
    %c0_i32_0 = arith.constant 0 : i32
    %c0_i32_1 = arith.constant 0 : i32
    return %c0_i32, %c0_i32_0 : i32, i32
  }
  func.func @transform_4(%arg0: i32, %arg1: i32) -> (i32, i32, i32) {
    %c0_i32 = arith.constant 0 : i32
    %c0_i32_0 = arith.constant 0 : i32
    %c0_i32_1 = arith.constant 0 : i32
    return %arg0, %c0_i32, %c0_i32_0 : i32, i32, i32
  }
}

</mosaic_0001>

<llo_original>
// kernel: tpu_custom_call.1
$region0: #{tpu_custom_call.1}
  #allocation0 [shape = 'u32[]', space=smem, size = 0x4, offset = 0x4, fixed_abs, tag = 'smem constant byte address 0x4 - core index']
  #allocation1 [shape = 'u32[144,128]{1,0:T(1,128)}', space=vmem, size = 0x12000, scoped, tag = 'internal scratch']
  #allocation2 [shape = 'f32[16,128]{1,0:T(8,128)}', space=vmem, size = 0x2000, scoped, tag = 'scratch operand']
  %s0 = inlined_call_operand.hbm [shape: f32[2,16,64], index: 0, kind: input, shape index: {}]
  %s1 = inlined_call_operand.hbm [shape: f32[3,16,16], index: 1, kind: input, shape index: {}]
  %s2 = inlined_call_operand.hbm [shape: f32[3,64,128], index: 2, kind: input, shape index: {}]
  %s3 = inlined_call_operand.hbm [shape: f32[1,128], index: 3, kind: input, shape index: {}]
  %s4 = inlined_call_operand.hbm [shape: f32[2,16,128], index: 4, kind: output, shape index: {}]
  %s5 = sld [smem:[#allocation0]]
  $region73: #{tpu_custom_call.1} parent=0
    _
  %s7 = ssub.s32 1, %s5
  %s8 = scalar_select 0, %s7, %s5
  $region1: #{tpu_custom_call.1} parent=0
    #allocation3 [shape = 'u8[16384]{0}', space=vmem, size = 0x4000, scoped, tag = 'input window, operand 0']
    #allocation4 [shape = 's32[2]{0}', space=sflag, size = 0x8, scoped, tag = 'scoped memory for tpu_custom_call.1']
    #allocation5 [shape = 's32[2]{0}', space=sflag, size = 0x8, scoped, tag = 'scoped memory for tpu_custom_call.1']
    #allocation6 [shape = 'u8[16384]{0}', space=vmem, size = 0x4000, scoped, tag = 'input window, operand 1']
    #allocation7 [shape = 's32[2]{0}', space=sflag, size = 0x8, scoped, tag = 'scoped memory for tpu_custom_call.1']
    #allocation8 [shape = 'u8[65536]{0}', space=vmem, size = 0x10000, scoped, tag = 'input window, operand 2']
    #allocation9 [shape = 'u8[512]{0}', space=vmem, size = 0x400, scoped, tag = 'input window, operand 3, single buffered']
    #allocation10 [shape = 's32[1]{0}', space=sflag, size = 0x4, scoped, tag = 'scoped memory for tpu_custom_call.1']
    #allocation11 [shape = 'u8[16384]{0}', space=vmem, size = 0x4000, scoped, tag = 'output window, operand 0']
    %9 = vsyncpa [#allocation4], 0
    %s10 = scalar_lea.sflag [#allocation4], 1
    %11 = vsyncpa %s10, 0
    %12 = vsyncpa [#allocation7], 0
    %s13 = scalar_lea.sflag [#allocation7], 1
    %14 = vsyncpa %s13, 0
    %15 = vsyncpa [#allocation10], 0
    %16 = vsyncpa [#allocation5], 0
    %s17 = scalar_lea.sflag [#allocation5], 1
    %18 = vsyncpa %s17, 0
    loop: start=0, step=1, limit=8
    $region2: #{tpu_custom_call.1} parent=1 // loop_pre_header
      _
    $region3: #{tpu_custom_call.1} parent=1 // loop_header
      %s20 = sphi 0, %s24
      %p21 = scmp.ge.s32.totalorder %s20, 8
      %s27 = sphi 0, %s39
      %s28 = sphi 0, %s35
      %s29 = sphi 0, %s27
      %s30 = sphi 0, %s28
      %s31 = sphi 0, %s29
      %s32 = sphi 0, %s30
      %s42 = sphi 0, %s44
      %s45 = sphi 0, %s42
      %s46 = sphi 0, %s45
      %s62 = sphi 0, %s46
      %s68 = sphi 0, %s70
      %s71 = sphi 0, %s68
      %s72 = sphi 0, %s71
      %s88 = sphi 0, %s72
      %s94 = sphi 0, %s96
      %s97 = sphi 0, %s94
      %s98 = sphi 0, %s97
      %s114 = sphi 0, %s98
      %s118 = sphi 0, %s118
      %s120 = sphi 0, %s118
      %s121 = sphi 0, %s120
      %s135 = sphi 0, %s121
      %s141 = sphi 0, %s143
      %s144 = sphi 0, %s141
      %s145 = sphi 0, %s144
      %s161 = sphi 0, %s145
    $region4: #{tpu_custom_call.1} parent=1 // loop_header_branch
      %23 = sbr.rel (%p21) target = $region8
    $region5: #{tpu_custom_call.1} parent=1 // loop_body
      %s25 = ssub.s32 %s20, 1
      %s26 = ssub.s32 %s20, 2
      %s33 = sadd.s32 1, %s28
      %p34 = scmp.ge.s32.totalorder %s33, 3
      %s35 = scalar_select %p34, 0, %s33
      %s36 = sadd.s32 1, %s27
      %s37 = scalar_select %p34, %s36, %s27
      %p38 = scmp.ge.s32.totalorder %s37, 2
      %s39 = scalar_select %p38, 0, %s37
      %s40 = ssub.s32 %s27, %s39
      %p41 = scmp.eq.s32.totalorder %s40, 0
      %s43 = sadd.s32 %s42, 1
      %s44 = scalar_select %p41, %s42, %s43
      %p47 = pneg %p41
      %p48 = scmp.eq.s32.totalorder %s20, 5
      %p49 = por %p47, %p48
      %p50 = scmp.ne.s32.totalorder %s42, %s45
      %p51 = scmp.eq.s32.totalorder %s20, 0
      %p52 = por %p50, %p51
      %p53 = scmp.ne.s32.totalorder %s42, %s45
      %p54 = scmp.eq.s32.totalorder %s25, 5
      %p55 = por %p53, %p54
      %p56 = scmp.ne.s32.totalorder %s45, %s46
      %p57 = scmp.eq.s32.totalorder %s25, 0
      %p58 = por %p56, %p57
      %p59 = scmp.ne.s32.totalorder %s45, %s46
      %p60 = scmp.eq.s32.totalorder %s26, 5
      %p61 = por %p59, %p60
      %p63 = scmp.ne.s32.totalorder %s46, %s62
      %p64 = scmp.eq.s32.totalorder %s26, 0
      %p65 = por %p63, %p64
      %s66 = ssub.s32 %s28, %s35
      %p67 = scmp.eq.s32.totalorder %s66, 0
      %s69 = sadd.s32 %s68, 1
      %s70 = scalar_select %p67, %s68, %s69
      %p73 = pneg %p67
      %p74 = scmp.eq.s32.totalorder %s20, 5
      %p75 = por %p73, %p74
      %p76 = scmp.ne.s32.totalorder %s68, %s71
      %p77 = scmp.eq.s32.totalorder %s20, 0
      %p78 = por %p76, %p77
      %p79 = scmp.ne.s32.totalorder %s68, %s71
      %p80 = scmp.eq.s32.totalorder %s25, 5
      %p81 = por %p79, %p80
      %p82 = scmp.ne.s32.totalorder %s71, %s72
      %p83 = scmp.eq.s32.totalorder %s25, 0
      %p84 = por %p82, %p83
      %p85 = scmp.ne.s32.totalorder %s71, %s72
      %p86 = scmp.eq.s32.totalorder %s26, 5
      %p87 = por %p85, %p86
      %p89 = scmp.ne.s32.totalorder %s72, %s88
      %p90 = scmp.eq.s32.totalorder %s26, 0
      %p91 = por %p89, %p90
      %s92 = ssub.s32 %s28, %s35
      %p93 = scmp.eq.s32.totalorder %s92, 0
      %s95 = sadd.s32 %s94, 1
      %s96 = scalar_select %p93, %s94, %s95
      %p99 = pneg %p93
      %p100 = scmp.eq.s32.totalorder %s20, 5
      %p101 = por %p99, %p100
      %p102 = scmp.ne.s32.totalorder %s94, %s97
      %p103 = scmp.eq.s32.totalorder %s20, 0
      %p104 = por %p102, %p103
      %p105 = scmp.ne.s32.totalorder %s94, %s97
      %p106 = scmp.eq.s32.totalorder %s25, 5
      %p107 = por %p105, %p106
      %p108 = scmp.ne.s32.totalorder %s97, %s98
      %p109 = scmp.eq.s32.totalorder %s25, 0
      %p110 = por %p108, %p109
      %p111 = scmp.ne.s32.totalorder %s97, %s98
      %p112 = scmp.eq.s32.totalorder %s26, 5
      %p113 = por %p111, %p112
      %p115 = scmp.ne.s32.totalorder %s98, %s114
      %p116 = scmp.eq.s32.totalorder %s26, 0
      %p117 = por %p115, %p116
      %s119 = sadd.s32 %s118, 1
      %p122 = scmp.eq.s32.totalorder %s20, 5
      %p123 = scmp.ne.s32.totalorder %s118, %s120
      %p124 = scmp.eq.s32.totalorder %s20, 0
      %p125 = por %p123, %p124
      %p126 = scmp.ne.s32.totalorder %s118, %s120
      %p127 = scmp.eq.s32.totalorder %s25, 5
      %p128 = por %p126, %p127
      %p129 = scmp.ne.s32.totalorder %s120, %s121
      %p130 = scmp.eq.s32.totalorder %s25, 0
      %p131 = por %p129, %p130
      %p132 = scmp.ne.s32.totalorder %s120, %s121
      %p133 = scmp.eq.s32.totalorder %s26, 5
      %p134 = por %p132, %p133
      %p136 = scmp.ne.s32.totalorder %s121, %s135
      %p137 = scmp.eq.s32.totalorder %s26, 0
      %p138 = por %p136, %p137
      %s139 = ssub.s32 %s27, %s39
      %p140 = scmp.eq.s32.totalorder %s139, 0
      %s142 = sadd.s32 %s141, 1
      %s143 = scalar_select %p140, %s141, %s142
      %p146 = pneg %p140
      %p147 = scmp.eq.s32.totalorder %s20, 5
      %p148 = por %p146, %p147
      %p149 = scmp.ne.s32.totalorder %s141, %s144
      %p150 = scmp.eq.s32.totalorder %s20, 0
      %p151 = por %p149, %p150
      %p152 = scmp.ne.s32.totalorder %s141, %s144
      %p153 = scmp.eq.s32.totalorder %s25, 5
      %p154 = por %p152, %p153
      %p155 = scmp.ne.s32.totalorder %s144, %s145
      %p156 = scmp.eq.s32.totalorder %s25, 0
      %p157 = por %p155, %p156
      %p158 = scmp.ne.s32.totalorder %s144, %s145
      %p159 = scmp.eq.s32.totalorder %s26, 5
      %p160 = por %p158, %p159
      %p162 = scmp.ne.s32.totalorder %s145, %s161
      %p163 = scmp.eq.s32.totalorder %s26, 0
      %p164 = por %p162, %p163
      %p165 = scmp.le.s32.totalorder 1, %s20
      %p166 = scmp.lt.s32.totalorder %s20, 7
      %p167 = pnand %p165, %p166
      %p168 = pneg %p167
      // Predicated region
      $region9: #{tpu_custom_call.1} parent=5 // pred_check
        _
      $region10: #{tpu_custom_call.1} parent=5 // pred_check_branch
        %170 = sbr.rel (%p167) target = $region12
      $region11: #{tpu_custom_call.1} parent=5 // pred_region
        %s171 = ssub.s32 %s20, 1
        // Predicated region
        $region13: #{tpu_custom_call.1} parent=11 // pred_check
          %p172 = pneg %p131
        $region14: #{tpu_custom_call.1} parent=11 // pred_check_branch
          %174 = sbr.rel (%p172) target = $region16
        $region15: #{tpu_custom_call.1} parent=11 // pred_region
          %s176 = ssub.s32 16, 16
          %177 = vsyncadd [#allocation10], %s176
          %s179 = sshll.u32 [#allocation9], 4
          %s180 = int_to_ptr.vmem [resolvable:$true] %s179
          %182 = dma.hbm_to_vmem [thread:$0]  %s3, 16, %s180, [#allocation10]
        $region16: #{tpu_custom_call.1} parent=11 // pred_fallthru
          _
      $region12: #{tpu_custom_call.1} parent=5 // pred_fallthru
        _
      %p183 = scmp.lt.s32.totalorder %s20, 6
      // Predicated region
      $region17: #{tpu_custom_call.1} parent=5 // pred_check
        %p184 = pneg %p183
      $region18: #{tpu_custom_call.1} parent=5 // pred_check_branch
        %186 = sbr.rel (%p184) target = $region20
      $region19: #{tpu_custom_call.1} parent=5 // pred_region
        // Predicated region
        $region21: #{tpu_custom_call.1} parent=19 // pred_check
          %p187 = pneg %p52
        $region22: #{tpu_custom_call.1} parent=19 // pred_check_branch
          %189 = sbr.rel (%p187) target = $region24
        $region23: #{tpu_custom_call.1} parent=19 // pred_region
          %s190 = sand.u32 %s42, 1
          %s191 = scalar_lea.sflag [#allocation4], %s190
          %s192 = sand.u32 %s42, 1
          %s193 = smul.addr %s192, 16
          %s194 = scalar_lea.vmem [#allocation3], %s193
          %s196 = ssub.s32 256, 256
          %197 = vsyncadd %s191, %s196
          %s198 = smul.addr %s27, 2
          %s199 = smul.addr %s198, 128
          %s200 = scalar_lea.hbm %s0, %s199
          %s201 = sshll.u32 %s194, 4
          %s202 = int_to_ptr.vmem [resolvable:$true] %s201
          %207 = dma.hbm_to_vmem [thread:$0]  %s200, 256, %s202, %s191, 128, 128, 8
        $region24: #{tpu_custom_call.1} parent=19 // pred_fallthru
          _
        // Predicated region
        $region25: #{tpu_custom_call.1} parent=19 // pred_check
          %p208 = pneg %p78
        $region26: #{tpu_custom_call.1} parent=19 // pred_check_branch
          %210 = sbr.rel (%p208) target = $region28
        $region27: #{tpu_custom_call.1} parent=19 // pred_region
          %s211 = sand.u32 %s20, 1
          %s212 = scalar_lea.sflag [#allocation7], %s211
          %s213 = sand.u32 %s68, 1
          %s214 = smul.addr %s213, 16
          %s215 = scalar_lea.vmem [#allocation6], %s214
          %s217 = ssub.s32 256, 256
          %218 = vsyncadd %s212, %s217
          %s219 = smul.addr %s28, 2
          %s220 = smul.addr %s219, 128
          %s221 = scalar_lea.hbm %s1, %s220
          %s222 = sshll.u32 %s215, 4
          %s223 = int_to_ptr.vmem [resolvable:$true] %s222
          %228 = dma.hbm_to_vmem [thread:$0]  %s221, 256, %s223, %s212, 128, 128, 8
        $region28: #{tpu_custom_call.1} parent=19 // pred_fallthru
          _
        // Predicated region
        $region29: #{tpu_custom_call.1} parent=19 // pred_check
          %p229 = pneg %p104
        $region30: #{tpu_custom_call.1} parent=19 // pred_check_branch
          %231 = sbr.rel (%p229) target = $region32
        $region31: #{tpu_custom_call.1} parent=19 // pred_region
          %s232 = sand.u32 %s20, 1
          %s233 = scalar_lea.sflag [#allocation7], %s232
          %s234 = sand.u32 %s94, 1
          %s235 = smul.addr %s234, 64
          %s236 = scalar_lea.vmem [#allocation8], %s235
          %s238 = ssub.s32 1024, 1024
          %239 = vsyncadd %s233, %s238
          %s240 = smul.addr %s28, 8
          %s241 = smul.addr %s240, 128
          %s242 = scalar_lea.hbm %s2, %s241
          %s243 = sshll.u32 %s236, 4
          %s244 = int_to_ptr.vmem [resolvable:$true] %s243
          %249 = dma.hbm_to_vmem [thread:$0]  %s242, 1024, %s244, %s233, 128, 128, 8
        $region32: #{tpu_custom_call.1} parent=19 // pred_fallthru
          _
      $region20: #{tpu_custom_call.1} parent=5 // pred_fallthru
        _
      %p250 = scmp.le.s32.totalorder 1, %s20
      %p251 = scmp.lt.s32.totalorder %s20, 7
      %p252 = pnand %p250, %p251
      %p253 = pneg %p252
      // Predicated region
      $region33: #{tpu_custom_call.1} parent=5 // pred_check
        _
      $region34: #{tpu_custom_call.1} parent=5 // pred_check_branch
        %255 = sbr.rel (%p252) target = $region36
      $region35: #{tpu_custom_call.1} parent=5 // pred_region
        %s256 = ssub.s32 %s20, 1
        %s257 = sand.u32 %s45, 1
        %s258 = scalar_lea.sflag [#allocation4], %s257
        %s259 = sand.u32 %s45, 1
        %s260 = smul.addr %s259, 16
        %s261 = scalar_lea.vmem [#allocation3], %s260
        // Predicated region
        $region37: #{tpu_custom_call.1} parent=35 // pred_check
          %p262 = pneg %p58
        $region38: #{tpu_custom_call.1} parent=35 // pred_check_branch
          %264 = sbr.rel (%p262) target = $region40
        $region39: #{tpu_custom_call.1} parent=35 // pred_region
          %265 = dma.done %s258, 256
        $region40: #{tpu_custom_call.1} parent=35 // pred_fallthru
          _
        %s266 = sand.u32 %s25, 1
        %s267 = scalar_lea.sflag [#allocation7], %s266
        %s268 = sand.u32 %s71, 1
        %s269 = smul.addr %s268, 16
        %s270 = scalar_lea.vmem [#allocation6], %s269
        // Predicated region
        $region41: #{tpu_custom_call.1} parent=35 // pred_check
          %p271 = pneg %p84
        $region42: #{tpu_custom_call.1} parent=35 // pred_check_branch
          %273 = sbr.rel (%p271) target = $region44
        $region43: #{tpu_custom_call.1} parent=35 // pred_region
          %274 = dma.done %s267, 256
        $region44: #{tpu_custom_call.1} parent=35 // pred_fallthru
          _
        %s275 = sand.u32 %s25, 1
        %s276 = scalar_lea.sflag [#allocation7], %s275
        %s277 = sand.u32 %s97, 1
        %s278 = smul.addr %s277, 64
        %s279 = scalar_lea.vmem [#allocation8], %s278
        // Predicated region
        $region45: #{tpu_custom_call.1} parent=35 // pred_check
          %p280 = pneg %p110
        $region46: #{tpu_custom_call.1} parent=35 // pred_check_branch
          %282 = sbr.rel (%p280) target = $region48
        $region47: #{tpu_custom_call.1} parent=35 // pred_region
          %283 = dma.done %s276, 1024
        $region48: #{tpu_custom_call.1} parent=35 // pred_fallthru
          _
        // Predicated region
        $region49: #{tpu_custom_call.1} parent=35 // pred_check
          %p284 = pneg %p131
        $region50: #{tpu_custom_call.1} parent=35 // pred_check_branch
          %286 = sbr.rel (%p284) target = $region52
        $region51: #{tpu_custom_call.1} parent=35 // pred_region
          %287 = dma.done [#allocation10], 16
        $region52: #{tpu_custom_call.1} parent=35 // pred_fallthru
          _
        %s288 = sand.u32 %s45, 1
        %s289 = scalar_lea.sflag [#allocation4], %s288
        %s290 = sand.u32 %s45, 1
        %s291 = smul.addr %s290, 16
        %s292 = scalar_lea.vmem [#allocation3], %s291
        %p293 = pneg %p58
        %p294 = pneg %p55
        %s295 = sand.u32 %s25, 1
        %s296 = scalar_lea.sflag [#allocation7], %s295
        %s297 = sand.u32 %s71, 1
        %s298 = smul.addr %s297, 16
        %s299 = scalar_lea.vmem [#allocation6], %s298
        %p300 = pneg %p84
        %p301 = pneg %p81
        %s302 = sand.u32 %s25, 1
        %s303 = scalar_lea.sflag [#allocation7], %s302
        %s304 = sand.u32 %s97, 1
        %s305 = smul.addr %s304, 64
        %s306 = scalar_lea.vmem [#allocation8], %s305
        %p307 = pneg %p110
        %p308 = pneg %p107
        %p309 = pneg %p131
        %p310 = pneg %p128
        %p311 = pneg %p157
        %p312 = pneg %p154
        %s313 = sand.u32 %s144, 1
        %s314 = scalar_lea.sflag [#allocation5], %s313
        %s315 = sand.u32 %s144, 1
        %s316 = smul.addr %s315, 16
        %s317 = scalar_lea.vmem [#allocation11], %s316
        %p318 = scmp.eq.s32.totalorder %s30, 0
        // Predicated region
        $region53: #{tpu_custom_call.1} parent=35 // pred_check
          %p319 = pneg %p318
        $region54: #{tpu_custom_call.1} parent=35 // pred_check_branch
          %321 = sbr.rel (%p319) target = $region56
        $region55: #{tpu_custom_call.1} parent=35 // pred_region
          %322 = vst [vmem:[#allocation2] sm:$0xff] 0.0
          %323 = vst [vmem:[#allocation2 + $0x8] sm:$0xff] 0.0
        $region56: #{tpu_custom_call.1} parent=35 // pred_fallthru
          _
        %v324 = vld [vmem:[%s270] sm:$0xff]
        %v325 = vld [vmem:[%s270 + $0x8] sm:$0xff]
        %v326 = vld [vmem:[%s261] sm:$0xff]
        %v327 = vld [vmem:[%s261 + $0x8] sm:$0xff]
        %vm328 = vcmask 130048
        %v330 = vsel %vm328, %v324, 0
        %v333 = vsel %vm328, %v325, 0
        %335 = vmatprep.subr.mxu0 0.0
        %336 = vmatpush1.msra.mxu0 %v326
        %337 = vmatprep.subr.mxu0 0.0
        %338 = vmatpush1.msra.mxu0 %v327
        %339 = vmatprep.subr.mxu0 0.0
        %340 = vmatpush1.msra.mxu0 0.0
        %341 = vmatprep.subr.mxu0 0.0
        %342 = vmatpush1.msra.mxu0 0.0
        %343 = vmatprep.subr.mxu0 0.0
        %344 = vmatpush1.msra.mxu0 0.0
        %345 = vmatprep.subr.mxu0 0.0
        %346 = vmatpush1.msra.mxu0 0.0
        %347 = vmatprep.subr.mxu0 0.0
        %348 = vmatpush1.msra.mxu0 0.0
        %349 = vmatprep.subr.mxu0 0.0
        %350 = vmatpush1.msra.mxu0 0.0
        %351 = vmatprep.subr.mxu0 0.0
        %352 = vmatpush1.msra.mxu0 0.0
        %353 = vmatprep.subr.mxu0 0.0
        %354 = vmatpush1.msra.mxu0 0.0
        %355 = vmatprep.subr.mxu0 0.0
        %356 = vmatpush1.msra.mxu0 0.0
        %357 = vmatprep.subr.mxu0 0.0
        %358 = vmatpush1.msra.mxu0 0.0
        %359 = vmatprep.subr.mxu0 0.0
        %360 = vmatpush1.msra.mxu0 0.0
        %361 = vmatprep.subr.mxu0 0.0
        %362 = vmatpush1.msra.mxu0 0.0
        %363 = vmatprep.subr.mxu0 0.0
        %364 = vmatpush1.msra.mxu0 0.0
        %365 = vmatprep.subr.mxu0 0.0
        %366 = vmatpush1.msra.mxu0 0.0
        %367 = vmatprep.subr.mxu0 0.0
        %368 = vmatpush1.msra.mxu0 0.0
        %369 = vmatprep.subr.mxu0 0.0
        %370 = vmatpush1.msra.mxu0 0.0
        %371 = vmatprep.subr.mxu0 0.0
        %372 = vmatpush1.msra.mxu0 0.0
        %373 = vmatprep.subr.mxu0 0.0
        %374 = vmatpush1.msra.mxu0 0.0
        %375 = vmatprep.subr.mxu0 0.0
        %376 = vmatpush1.msra.mxu0 0.0
        %377 = vmatprep.subr.mxu0 0.0
        %378 = vmatpush1.msra.mxu0 0.0
        %379 = vmatprep.subr.mxu0 0.0
        %380 = vmatpush1.msra.mxu0 0.0
        %381 = vmatprep.subr.mxu0 0.0
        %382 = vmatpush1.msra.mxu0 0.0
        %383 = vmatprep.subr.mxu0 0.0
        %384 = vmatpush1.msra.mxu0 0.0
        %385 = vmatprep.subr.mxu0 0.0
        %386 = vmatpush1.msra.mxu0 0.0
        %387 = vmatprep.subr.mxu0 0.0
        %388 = vmatpush1.msra.mxu0 0.0
        %389 = vmatprep.subr.mxu0 0.0
        %390 = vmatpush1.msra.mxu0 0.0
        %391 = vmatprep.subr.mxu0 0.0
        %392 = vmatpush1.msra.mxu0 0.0
        %393 = vmatprep.subr.mxu0 0.0
        %394 = vmatpush1.msra.mxu0 0.0
        %395 = vmatprep.subr.mxu0 0.0
        %396 = vmatpush1.msra.mxu0 0.0
        %397 = vmatprep.subr.mxu0 0.0
        %398 = vmatpush1.msra.mxu0 0.0
        %399 = vmatprep.mubr.f32.mxu0 0.0
        %400 = vmatmul.mubr.f32.gmra.mrb[0].mxu0 %v330
        %v401 = vpop.f32.mrb[0].mxu0
        %v402 = vadd.f32 0.0, %v401
        %v403 = vpop.f32.mrb[0].mxu0
        %404 = vmatprep.mubr.f32.mxu0 0.0
        %405 = vmatmul.mubr.f32.gmra.mrb[0].mxu0 %v333
        %v406 = vpop.f32.mrb[0].mxu0
        %v407 = vadd.f32 0.0, %v406
        %v408 = vpop.f32.mrb[0].mxu0
        %409 = vdwg.mxu0
        %v410 = vld [vmem:[#allocation2] sm:$0xff]
        %v411 = vld [vmem:[#allocation2 + $0x8] sm:$0xff]
        %v412 = vld [vmem:[%s279] sm:$0xff]
        %v413 = vld [vmem:[%s279 + $0x8] sm:$0xff]
        %v414 = vld [vmem:[%s279 + $0x10] sm:$0xff]
        %v415 = vld [vmem:[%s279 + $0x18] sm:$0xff]
        %v416 = vld [vmem:[%s279 + $0x20] sm:$0xff]
        %v417 = vld [vmem:[%s279 + $0x28] sm:$0xff]
        %v418 = vld [vmem:[%s279 + $0x30] sm:$0xff]
        %v419 = vld [vmem:[%s279 + $0x38] sm:$0xff]
        %vm420 = vcmask 523264
        %v422 = vsel %vm420, %v402, 0
        %v425 = vsel %vm420, %v407, 0
        %427 = vmatprep.subr.mxu0 0.0
        %428 = vmatpush1.msra.mxu0 %v412
        %429 = vmatprep.subr.mxu0 0.0
        %430 = vmatpush1.msra.mxu0 %v413
        %431 = vmatprep.subr.mxu0 0.0
        %432 = vmatpush1.msra.mxu0 %v414
        %433 = vmatprep.subr.mxu0 0.0
        %434 = vmatpush1.msra.mxu0 %v415
        %435 = vmatprep.subr.mxu0 0.0
        %436 = vmatpush1.msra.mxu0 %v416
        %437 = vmatprep.subr.mxu0 0.0
        %438 = vmatpush1.msra.mxu0 %v417
        %439 = vmatprep.subr.mxu0 0.0
        %440 = vmatpush1.msra.mxu0 %v418
        %441 = vmatprep.subr.mxu0 0.0
        %442 = vmatpush1.msra.mxu0 %v419
        %443 = vmatprep.subr.mxu0 0.0
        %444 = vmatpush1.msra.mxu0 0.0
        %445 = vmatprep.subr.mxu0 0.0
        %446 = vmatpush1.msra.mxu0 0.0
        %447 = vmatprep.subr.mxu0 0.0
        %448 = vmatpush1.msra.mxu0 0.0
        %449 = vmatprep.subr.mxu0 0.0
        %450 = vmatpush1.msra.mxu0 0.0
        %451 = vmatprep.subr.mxu0 0.0
        %452 = vmatpush1.msra.mxu0 0.0
        %453 = vmatprep.subr.mxu0 0.0
        %454 = vmatpush1.msra.mxu0 0.0
        %455 = vmatprep.subr.mxu0 0.0
        %456 = vmatpush1.msra.mxu0 0.0
        %457 = vmatprep.subr.mxu0 0.0
        %458 = vmatpush1.msra.mxu0 0.0
        %459 = vmatprep.subr.mxu0 0.0
        %460 = vmatpush1.msra.mxu0 0.0
        %461 = vmatprep.subr.mxu0 0.0
        %462 = vmatpush1.msra.mxu0 0.0
        %463 = vmatprep.subr.mxu0 0.0
        %464 = vmatpush1.msra.mxu0 0.0
        %465 = vmatprep.subr.mxu0 0.0
        %466 = vmatpush1.msra.mxu0 0.0
        %467 = vmatprep.subr.mxu0 0.0
        %468 = vmatpush1.msra.mxu0 0.0
        %469 = vmatprep.subr.mxu0 0.0
        %470 = vmatpush1.msra.mxu0 0.0
        %471 = vmatprep.subr.mxu0 0.0
        %472 = vmatpush1.msra.mxu0 0.0
        %473 = vmatprep.subr.mxu0 0.0
        %474 = vmatpush1.msra.mxu0 0.0
        %475 = vmatprep.subr.mxu0 0.0
        %476 = vmatpush1.msra.mxu0 0.0
        %477 = vmatprep.subr.mxu0 0.0
        %478 = vmatpush1.msra.mxu0 0.0
        %479 = vmatprep.subr.mxu0 0.0
        %480 = vmatpush1.msra.mxu0 0.0
        %481 = vmatprep.subr.mxu0 0.0
        %482 = vmatpush1.msra.mxu0 0.0
        %483 = vmatprep.subr.mxu0 0.0
        %484 = vmatpush1.msra.mxu0 0.0
        %485 = vmatprep.subr.mxu0 0.0
        %486 = vmatpush1.msra.mxu0 0.0
        %487 = vmatprep.subr.mxu0 0.0
        %488 = vmatpush1.msra.mxu0 0.0
        %489 = vmatprep.subr.mxu0 0.0
        %490 = vmatpush1.msra.mxu0 0.0
        %491 = vmatprep.mubr.f32.mxu0 0.0
        %492 = vmatmul.mubr.f32.gmra.mrb[0].mxu0 %v422
        %v493 = vpop.f32.mrb[0].mxu0
        %v494 = vadd.f32 0.0, %v493
        %v495 = vpop.f32.mrb[0].mxu0
        %496 = vmatprep.mubr.f32.mxu0 0.0
        %497 = vmatmul.mubr.f32.gmra.mrb[0].mxu0 %v425
        %v498 = vpop.f32.mrb[0].mxu0
        %v499 = vadd.f32 0.0, %v498
        %v500 = vpop.f32.mrb[0].mxu0
        %501 = vdwg.mxu0
        %v502 = vadd.f32 %v410, %v494
        %v503 = vadd.f32 %v411, %v499
        %504 = vst [vmem:[#allocation2] sm:$0xff] %v502
        %505 = vst [vmem:[#allocation2 + $0x8] sm:$0xff] %v503
        %p506 = scmp.eq.s32.totalorder %s30, 2
        // Predicated region
        $region57: #{tpu_custom_call.1} parent=35 // pred_check
          %p507 = pneg %p506
        $region58: #{tpu_custom_call.1} parent=35 // pred_check_branch
          %509 = sbr.rel (%p507) target = $region60
        $region59: #{tpu_custom_call.1} parent=35 // pred_region
          %v510 = vld [vmem:[#allocation2] sm:$0xff]
          %v511 = vld [vmem:[#allocation2 + $0x8] sm:$0xff]
          %v512 = vld [vmem:[#allocation9] sm:$0x1]
          %v514 = vlaneseq
          %v515 = vshrl.u32 %v514, 7
          %v516 = vsub.s32 0, %v515
          %v517 = vrot.slane %v512, %v516
          %v519 = vadd.f32 %v510, %v517
          %v520 = vadd.f32 %v511, %v517
          %521 = vst [vmem:[%s317] sm:$0xff] %v519
          %522 = vst [vmem:[%s317 + $0x8] sm:$0xff] %v520
        $region60: #{tpu_custom_call.1} parent=35 // pred_fallthru
          _
        %s523 = sand.u32 %s144, 1
        %s524 = scalar_lea.sflag [#allocation5], %s523
        %s525 = sand.u32 %s144, 1
        %s526 = smul.addr %s525, 16
        %s527 = scalar_lea.vmem [#allocation11], %s526
        // Predicated region
        $region61: #{tpu_custom_call.1} parent=35 // pred_check
          %p528 = pneg %p154
        $region62: #{tpu_custom_call.1} parent=35 // pred_check_branch
          %530 = sbr.rel (%p528) target = $region64
        $region63: #{tpu_custom_call.1} parent=35 // pred_region
          %s532 = ssub.s32 256, 256
          %533 = vsyncadd %s524, %s532
          %s534 = smul.addr %s29, 2
          %s535 = smul.addr %s534, 128
          %s536 = scalar_lea.hbm %s4, %s535
          %s537 = sshll.u32 %s527, 4
          %s538 = int_to_ptr.vmem [resolvable:$true] %s537
          %543 = dma.vmem_to_hbm [thread:$0]  %s538, 256, %s536, %s524, 128, 128, 8
        $region64: #{tpu_custom_call.1} parent=35 // pred_fallthru
          _
      $region36: #{tpu_custom_call.1} parent=5 // pred_fallthru
        _
      %p544 = scmp.le.s32.totalorder 2, %s20
      // Predicated region
      $region65: #{tpu_custom_call.1} parent=5 // pred_check
        %p545 = pneg %p544
      $region66: #{tpu_custom_call.1} parent=5 // pred_check_branch
        %547 = sbr.rel (%p545) target = $region68
      $region67: #{tpu_custom_call.1} parent=5 // pred_region
        %s548 = ssub.s32 %s20, 2
        // Predicated region
        $region69: #{tpu_custom_call.1} parent=67 // pred_check
          %p549 = pneg %p160
        $region70: #{tpu_custom_call.1} parent=67 // pred_check_branch
          %551 = sbr.rel (%p549) target = $region72
        $region71: #{tpu_custom_call.1} parent=67 // pred_region
          %s552 = sand.u32 %s145, 1
          %s553 = scalar_lea.sflag [#allocation5], %s552
          %s554 = sand.u32 %s145, 1
          %s555 = smul.addr %s554, 16
          %s556 = scalar_lea.vmem [#allocation11], %s555
          %557 = dma.done %s553, 256
        $region72: #{tpu_custom_call.1} parent=67 // pred_fallthru
          _
      $region68: #{tpu_custom_call.1} parent=5 // pred_fallthru
        _
    $region6: #{tpu_custom_call.1} parent=1 // loop_footer
      %s24 = sadd.s32 1, %s20
    $region7: #{tpu_custom_call.1} parent=1 // loop_footer_branch
      %19 = sbr.rel target = $region3
    $region8: #{tpu_custom_call.1} parent=1 // loop_exit
      _
    %558 = vsyncpa [#allocation4], 1
    %s559 = scalar_lea.sflag [#allocation4], 1
    %560 = vsyncpa %s559, 1
    %561 = vsyncpa [#allocation7], 1
    %s562 = scalar_lea.sflag [#allocation7], 1
    %563 = vsyncpa %s562, 1
    %564 = vsyncpa [#allocation10], 1
    %565 = vsyncpa [#allocation5], 1
    %s566 = scalar_lea.sflag [#allocation5], 1
    %567 = vsyncpa %s566, 1

</llo_original>
